<compile_context>
chip_gen: v7x
topology: tpu7x:2x2x1
jax: 0.10.0
libtpu: 0.0.40
codegen_flags: <defaults>
</compile_context>

<pallas_src>
import functools
import random

import numpy as np
import jax
import jax.numpy as jnp
from jax.experimental import pallas as pl
from jax.experimental.pallas import tpu as pltpu


# ----------------------------------------------------------------------------
# Parameter setup (glue, plain numpy) — deterministic re-implementation of the
# module's __init__ sampling (kernel length in {7,9,11}, dilation 2**U(0,A),
# mean-centred normal weights, uniform(-1,1) bias).
# ----------------------------------------------------------------------------
def build_rocket_params(num_kernels, max_receptive_field, time_steps, seed=0):
    rng = np.random.RandomState(seed)
    pyrng = random.Random(seed)

    conv_mats = np.zeros((num_kernels, time_steps, time_steps), dtype=np.float32)
    biases = np.zeros((num_kernels,), dtype=np.float32)
    meta = []  # (kernel_length, dilation, weights) — kept for the numpy reference

    for k in range(num_kernels):
        kernel_length = pyrng.choice((7, 9, 11))
        upper = np.log2((max_receptive_field - 1) / (kernel_length - 1))
        upper = max(float(upper), 0.0)                    # guard upper <= 0
        dilation = max(int(2.0 ** rng.uniform(0.0, upper)), 1)  # guard dilation >= 1

        w = rng.normal(0.0, 1.0, size=kernel_length).astype(np.float32)
        w = w - w.mean()                        # mean-centre, as in _sample_weights
        b = np.float32(rng.uniform(-1.0, 1.0))  # _sample_bias

        biases[k] = b
        # 'same' padding for odd kernel length: pad = dilation*(L-1)/2 per side.
        pad = dilation * (kernel_length - 1) // 2
        for t in range(time_steps):
            for j in range(kernel_length):
                s = t + j * dilation - pad
                if 0 <= s < time_steps:
                    conv_mats[k, s, t] += w[j]
        meta.append((kernel_length, dilation, w))

    return conv_mats, biases, meta


def _round_up(n, m):
    return ((n + m - 1) // m) * m


def pack_rocket_params(conv_mats, biases, *, lane=128, group_size=None,
                       m_block_budget_bytes=8 << 20, itemsize=4):
    """Pad T to a lane multiple and pack G rocket kernels into one wide RHS slab.

    Returns (m_grouped (ng, Tp, G*Tp), biases_padded (K_pad,), info dict).
    """
    K, T, T2 = conv_mats.shape
    assert T == T2
    Tp = _round_up(max(T, 1), lane)

    if group_size is None:
        # Keep the double-buffered M slab inside the VMEM budget (v7x: 64 MiB
        # total) while targeting a >=1024-wide MXU N dimension.
        g_vmem = max(1, m_block_budget_bytes // (Tp * Tp * itemsize))
        g_target = max(1, 1024 // Tp)
        group_size = int(max(1, min(K, g_vmem, g_target)))
    G = int(group_size)
    K_pad = _round_up(K, G)
    ng = K_pad // G

    m_pad = np.zeros((K_pad, Tp, Tp), dtype=np.float32)
    m_pad[:K, :T, :T] = conv_mats
    b_pad = np.zeros((K_pad,), dtype=np.float32)
    b_pad[:K] = biases

    # group g, column block j holds M_{g*G+j}:  Y[:, j*Tp:(j+1)*Tp] = x @ M_{g*G+j}
    m_grouped = np.ascontiguousarray(
        m_pad.reshape(ng, G, Tp, Tp).transpose(0, 2, 1, 3).reshape(ng, Tp, G * Tp))

    info = dict(T=T, Tp=Tp, K=K, K_pad=K_pad, G=G, ng=ng)
    return m_grouped, b_pad, info


# ----------------------------------------------------------------------------
# Pallas kernel: G rocket kernels per grid step.
#   Y   = x @ [M_g0 | M_g1 | ... | M_g(G-1)]        (BCp, G*Tp) — one MXU matmul
#   per kernel j:  ppv_j = mean(y_j > 0, time), max_j = max(y_j, time)
# ----------------------------------------------------------------------------
def _rocket_group_kernel(bias_ref, x_ref, m_ref, ppv_ref, max_ref, *, G, Tp, T):
    g = pl.program_id(0)

    x = x_ref[...]                                   # (BCp, Tp)
    m = m_ref[...]                                   # (Tp, G*Tp), leading dim squeezed
    y = jnp.dot(x, m, preferred_element_type=jnp.float32)   # (BCp, G*Tp) f32

    BCp = x_ref.shape[0]
    t_idx = jax.lax.broadcasted_iota(jnp.int32, (BCp, Tp), 1)
    valid = t_idx < T                                # mask for padded time lanes
    neg_inf = jnp.float32(-jnp.inf)
    inv_t = jnp.float32(1.0 / T)

    ppv_cols = []
    max_cols = []
    for j in range(G):                               # static unroll over the group
        yj = y[:, j * Tp:(j + 1) * Tp] + bias_ref[g * G + j]   # (BCp, Tp)
        yj = jnp.where(valid, yj, neg_inf)
        # torch.heaviside(y, 0.) == (y > 0) as float (0 at y == 0); -inf lanes -> 0.
        ppv_cols.append(
            jnp.sum((yj > 0).astype(jnp.float32), axis=-1, keepdims=True) * inv_t)
        max_cols.append(jnp.max(yj, axis=-1, keepdims=True))

    ppv_ref[...] = jnp.concatenate(ppv_cols, axis=-1)   # (BCp, G) lane-dense store
    max_ref[...] = jnp.concatenate(max_cols, axis=-1)   # (BCp, G)


def rocket_conv_forward(x, m_grouped, biases, info, matmul_dtype=jnp.float32):
    """x: (B, 1, C, T) float32  ->  (B, C, 2 * num_kernels) float32."""
    B, one, C, T = x.shape
    assert one == 1
    assert T == info["T"]
    BC = B * C
    Tp, G, ng = info["Tp"], info["G"], info["ng"]
    K, K_pad = info["K"], info["K_pad"]
    BCp = _round_up(BC, 8)

    # Pad rows to a sublane multiple and time to a lane multiple; optional bf16
    # cast for the dominant conv-matrix HBM stream.
    x2d = x.reshape(BC, T)
    x_pad = jnp.zeros((BCp, Tp), dtype=matmul_dtype)
    x_pad = x_pad.at[:BC, :T].set(x2d.astype(matmul_dtype))
    m_grouped = m_grouped.astype(matmul_dtype)
    biases = biases.astype(jnp.float32)

    kernel = functools.partial(_rocket_group_kernel, G=G, Tp=Tp, T=T)

    # Explicit scoped-VMEM budget: double-buffered M slab + resident x + outputs.
    itemsize = jnp.dtype(matmul_dtype).itemsize
    m_block_bytes = Tp * G * Tp * itemsize
    need = 2 * m_block_bytes + 2 * BCp * Tp * itemsize + 4 * BCp * G * 4 + (2 << 20)
    vmem_limit = int(min(max(need, 32 << 20), 48 << 20))

    ppv, mx = pl.pallas_call(
        kernel,
        out_shape=(
            jax.ShapeDtypeStruct((ng, BCp, G), jnp.float32),
            jax.ShapeDtypeStruct((ng, BCp, G), jnp.float32),
        ),
        grid_spec=pltpu.PrefetchScalarGridSpec(
            num_scalar_prefetch=0,
            grid=(ng,),
            in_specs=[
                # biases: whole (K_pad,) vector in SMEM, scalar-indexed.
                pl.BlockSpec(memory_space=pltpu.MemorySpace.SMEM),
                # x: same (BCp, Tp) block every grid step (resident in VMEM).
                pl.BlockSpec((BCp, Tp), lambda g: (0, 0)),
                # conv matrices: one (Tp, G*Tp) slab per grid step (leading dim squeezed).
                pl.BlockSpec((None, Tp, G * Tp), lambda g: (g, 0, 0)),
            ],
            out_specs=[
                pl.BlockSpec((None, BCp, G), lambda g: (g, 0, 0)),
                pl.BlockSpec((None, BCp, G), lambda g: (g, 0, 0)),
            ],
        ),
        compiler_params=pltpu.CompilerParams(
            dimension_semantics=("parallel",),    # K groups independent -> v7x 2-TC split
            vmem_limit_bytes=vmem_limit,
        ),
    )(biases, x_pad, m_grouped)

    # (ng, BCp, G) -> (BCp, K_pad) -> strip padding -> interleave [ppv_k, max_k].
    ppv = jnp.transpose(ppv, (1, 0, 2)).reshape(BCp, K_pad)[:BC, :K]
    mx = jnp.transpose(mx, (1, 0, 2)).reshape(BCp, K_pad)[:BC, :K]
    feats = jnp.stack([ppv, mx], axis=-1).reshape(B, C, 2 * K)
    return feats


# ----------------------------------------------------------------------------
# Pure-numpy reference (direct dilated 'same' conv + ppv/max), for verification.
# ----------------------------------------------------------------------------
def reference_forward(x_np, meta, biases):
    B, _, C, T = x_np.shape
    outs = []
    for k, (L, d, w) in enumerate(meta):
        pad = d * (L - 1) // 2
        y = np.zeros((B, C, T), dtype=np.float64)
        for t in range(T):
            acc = np.full((B, C), float(biases[k]), dtype=np.float64)
            for j in range(L):
                s = t + j * d - pad
                if 0 <= s < T:
                    acc += float(w[j]) * x_np[:, 0, :, s].astype(np.float64)
            y[:, :, t] = acc
        ppv = (y > 0).mean(axis=-1)
        mx = y.max(axis=-1)
        outs.append(np.stack([ppv, mx], axis=-1))  # (B, C, 2)
    return np.concatenate(outs, axis=-1)           # (B, C, 2K)


if __name__ == "__main__":
    # Small shapes consistent with the module's forward: x = (batch, 1, channels, time).
    B, C, T = 2, 4, 16
    NUM_KERNELS = 8
    MAX_RECEPTIVE_FIELD = 16

    conv_mats_np, biases_np, meta = build_rocket_params(
        NUM_KERNELS, MAX_RECEPTIVE_FIELD, T, seed=0)
    m_grouped_np, biases_pad_np, info = pack_rocket_params(conv_mats_np, biases_np)

    key = jax.random.PRNGKey(0)
    x = jax.random.uniform(key, (B, 1, C, T), dtype=jnp.float32)

    feats = rocket_conv_forward(
        x, jnp.asarray(m_grouped_np), jnp.asarray(biases_pad_np), info,
        matmul_dtype=jnp.float32)   # bf16 available; f32 keeps ppv sign-exact
    feats = jax.block_until_ready(feats)

    assert feats.shape == (B, C, 2 * NUM_KERNELS), feats.shape

    ref = reference_forward(np.asarray(x), meta, biases_np)
    np.testing.assert_allclose(np.asarray(feats), ref, rtol=1e-3, atol=1e-3)

    print("KERNEL_OK")
</pallas_src>

<mosaic_0001>
module attributes {stable_mosaic.version = 11 : i64} {
  func.func @_rocket_group_kernel(%arg0: i32, %arg1: memref<8xf32, #tpu.memory_space<smem>>, %arg2: memref<8x128xf32, #tpu.memory_space<vmem>>, %arg3: memref<1x128x1024xf32, #tpu.memory_space<vmem>>, %arg4: memref<1x8x8xf32, #tpu.memory_space<vmem>>, %arg5: memref<1x8x8xf32, #tpu.memory_space<vmem>>) attributes {dimension_semantics = [#tpu.dimension_semantics<parallel>], iteration_bounds = array<i64: 1>, scalar_prefetch = 0 : i64, scratch_operands = 0 : i64, tpu.core_type = #tpu.core_type<tc>, window_params = [{transform_indices = @transform_0, window_bounds = array<i64: 8>}, {pipeline_mode = #tpu.pipeline_mode<synchronous>, transform_indices = @transform_1, window_bounds = array<i64: 8, 128>}, {transform_indices = @transform_2, window_bounds = array<i64: 1, 128, 1024>}, {transform_indices = @transform_3, window_bounds = array<i64: 1, 8, 8>}, {transform_indices = @transform_4, window_bounds = array<i64: 1, 8, 8>}]} {
    %c0 = arith.constant 0 : index
    %c0_0 = arith.constant 0 : index
    %0 = vector.load %arg2[%c0, %c0_0] : memref<8x128xf32, #tpu.memory_space<vmem>>, vector<8x128xf32>
    %c0_1 = arith.constant 0 : index
    %c0_2 = arith.constant 0 : index
    %c0_3 = arith.constant 0 : index
    %1 = vector.load %arg3[%c0_1, %c0_2, %c0_3] : memref<1x128x1024xf32, #tpu.memory_space<vmem>>, vector<1x128x1024xf32>
    %2 = vector.shape_cast %1 : vector<1x128x1024xf32> to vector<128x1024xf32>
    %cst = arith.constant dense<0.000000e+00> : vector<8x1024xf32>
    %3 = tpu.matmul %0, %2, %cst {dimension_numbers = #tpu.dot_dimension_numbers<[1], [0], [0], [1], [0, 0, 1, 1], [], []>} : vector<8x128xf32>, vector<128x1024xf32>, vector<8x1024xf32> -> vector<8x1024xf32>
    %4 = tpu.iota {dimensions = array<i32: 1>} : vector<8x128xi32>
    %c16_i32 = arith.constant 16 : i32
    %5 = vector.broadcast %c16_i32 : i32 to vector<8x128xi32>
    %6 = arith.cmpi slt, %4, %5 : vector<8x128xi32>
    %7 = vector.extract_strided_slice %3 {offsets = [0, 0], sizes = [8, 128], strides = [1, 1]} : vector<8x1024xf32> to vector<8x128xf32>
    %c8_i32 = arith.constant 8 : i32
    %8 = arith.muli %arg0, %c8_i32 : i32
    %c0_i32 = arith.constant 0 : i32
    %9 = arith.addi %8, %c0_i32 : i32
    %10 = arith.index_cast %9 : i32 to index
    %11 = memref.load %arg1[%10] : memref<8xf32, #tpu.memory_space<smem>>
    %12 = vector.broadcast %11 : f32 to vector<8x128xf32>
    %13 = arith.addf %7, %12 : vector<8x128xf32>
    %cst_4 = arith.constant 0xFF800000 : f32
    %14 = vector.broadcast %cst_4 : f32 to vector<8x128xf32>
    %15 = arith.select %6, %13, %14 : vector<8x128xi1>, vector<8x128xf32>
    %cst_5 = arith.constant 0.000000e+00 : f32
    %16 = vector.broadcast %cst_5 : f32 to vector<8x128xf32>
    %17 = arith.cmpf ogt, %15, %16 : vector<8x128xf32>
    %18 = arith.extui %17 : vector<8x128xi1> to vector<8x128xi32>
    %19 = arith.sitofp %18 : vector<8x128xi32> to vector<8x128xf32>
    %cst_6 = arith.constant dense<0.000000e+00> : vector<8xf32>
    %20 = vector.multi_reduction <add>, %19, %cst_6 [1] : vector<8x128xf32> to vector<8xf32>
    %21 = vector.shape_cast %20 : vector<8xf32> to vector<8x1xf32>
    %cst_7 = arith.constant 6.250000e-02 : f32
    %22 = vector.broadcast %cst_7 : f32 to vector<8x1xf32>
    %23 = arith.mulf %21, %22 : vector<8x1xf32>
    %cst_8 = arith.constant dense<0xFF800000> : vector<8xf32>
    %24 = vector.multi_reduction <maximumf>, %15, %cst_8 [1] : vector<8x128xf32> to vector<8xf32>
    %25 = vector.shape_cast %24 : vector<8xf32> to vector<8x1xf32>
    %26 = vector.extract_strided_slice %3 {offsets = [0, 128], sizes = [8, 128], strides = [1, 1]} : vector<8x1024xf32> to vector<8x128xf32>
    %c8_i32_9 = arith.constant 8 : i32
    %27 = arith.muli %arg0, %c8_i32_9 : i32
    %c1_i32 = arith.constant 1 : i32
    %28 = arith.addi %27, %c1_i32 : i32
    %29 = arith.index_cast %28 : i32 to index
    %30 = memref.load %arg1[%29] : memref<8xf32, #tpu.memory_space<smem>>
    %31 = vector.broadcast %30 : f32 to vector<8x128xf32>
    %32 = arith.addf %26, %31 : vector<8x128xf32>
    %cst_10 = arith.constant 0xFF800000 : f32
    %33 = vector.broadcast %cst_10 : f32 to vector<8x128xf32>
    %34 = arith.select %6, %32, %33 : vector<8x128xi1>, vector<8x128xf32>
    %cst_11 = arith.constant 0.000000e+00 : f32
    %35 = vector.broadcast %cst_11 : f32 to vector<8x128xf32>
    %36 = arith.cmpf ogt, %34, %35 : vector<8x128xf32>
    %37 = arith.extui %36 : vector<8x128xi1> to vector<8x128xi32>
    %38 = arith.sitofp %37 : vector<8x128xi32> to vector<8x128xf32>
    %cst_12 = arith.constant dense<0.000000e+00> : vector<8xf32>
    %39 = vector.multi_reduction <add>, %38, %cst_12 [1] : vector<8x128xf32> to vector<8xf32>
    %40 = vector.shape_cast %39 : vector<8xf32> to vector<8x1xf32>
    %cst_13 = arith.constant 6.250000e-02 : f32
    %41 = vector.broadcast %cst_13 : f32 to vector<8x1xf32>
    %42 = arith.mulf %40, %41 : vector<8x1xf32>
    %cst_14 = arith.constant dense<0xFF800000> : vector<8xf32>
    %43 = vector.multi_reduction <maximumf>, %34, %cst_14 [1] : vector<8x128xf32> to vector<8xf32>
    %44 = vector.shape_cast %43 : vector<8xf32> to vector<8x1xf32>
    %45 = vector.extract_strided_slice %3 {offsets = [0, 256], sizes = [8, 128], strides = [1, 1]} : vector<8x1024xf32> to vector<8x128xf32>
    %c8_i32_15 = arith.constant 8 : i32
    %46 = arith.muli %arg0, %c8_i32_15 : i32
    %c2_i32 = arith.constant 2 : i32
    %47 = arith.addi %46, %c2_i32 : i32
    %48 = arith.index_cast %47 : i32 to index
    %49 = memref.load %arg1[%48] : memref<8xf32, #tpu.memory_space<smem>>
    %50 = vector.broadcast %49 : f32 to vector<8x128xf32>
    %51 = arith.addf %45, %50 : vector<8x128xf32>
    %cst_16 = arith.constant 0xFF800000 : f32
    %52 = vector.broadcast %cst_16 : f32 to vector<8x128xf32>
    %53 = arith.select %6, %51, %52 : vector<8x128xi1>, vector<8x128xf32>
    %cst_17 = arith.constant 0.000000e+00 : f32
    %54 = vector.broadcast %cst_17 : f32 to vector<8x128xf32>
    %55 = arith.cmpf ogt, %53, %54 : vector<8x128xf32>
    %56 = arith.extui %55 : vector<8x128xi1> to vector<8x128xi32>
    %57 = arith.sitofp %56 : vector<8x128xi32> to vector<8x128xf32>
    %cst_18 = arith.constant dense<0.000000e+00> : vector<8xf32>
    %58 = vector.multi_reduction <add>, %57, %cst_18 [1] : vector<8x128xf32> to vector<8xf32>
    %59 = vector.shape_cast %58 : vector<8xf32> to vector<8x1xf32>
    %cst_19 = arith.constant 6.250000e-02 : f32
    %60 = vector.broadcast %cst_19 : f32 to vector<8x1xf32>
    %61 = arith.mulf %59, %60 : vector<8x1xf32>
    %cst_20 = arith.constant dense<0xFF800000> : vector<8xf32>
    %62 = vector.multi_reduction <maximumf>, %53, %cst_20 [1] : vector<8x128xf32> to vector<8xf32>
    %63 = vector.shape_cast %62 : vector<8xf32> to vector<8x1xf32>
    %64 = vector.extract_strided_slice %3 {offsets = [0, 384], sizes = [8, 128], strides = [1, 1]} : vector<8x1024xf32> to vector<8x128xf32>
    %c8_i32_21 = arith.constant 8 : i32
    %65 = arith.muli %arg0, %c8_i32_21 : i32
    %c3_i32 = arith.constant 3 : i32
    %66 = arith.addi %65, %c3_i32 : i32
    %67 = arith.index_cast %66 : i32 to index
    %68 = memref.load %arg1[%67] : memref<8xf32, #tpu.memory_space<smem>>
    %69 = vector.broadcast %68 : f32 to vector<8x128xf32>
    %70 = arith.addf %64, %69 : vector<8x128xf32>
    %cst_22 = arith.constant 0xFF800000 : f32
    %71 = vector.broadcast %cst_22 : f32 to vector<8x128xf32>
    %72 = arith.select %6, %70, %71 : vector<8x128xi1>, vector<8x128xf32>
    %cst_23 = arith.constant 0.000000e+00 : f32
    %73 = vector.broadcast %cst_23 : f32 to vector<8x128xf32>
    %74 = arith.cmpf ogt, %72, %73 : vector<8x128xf32>
    %75 = arith.extui %74 : vector<8x128xi1> to vector<8x128xi32>
    %76 = arith.sitofp %75 : vector<8x128xi32> to vector<8x128xf32>
    %cst_24 = arith.constant dense<0.000000e+00> : vector<8xf32>
    %77 = vector.multi_reduction <add>, %76, %cst_24 [1] : vector<8x128xf32> to vector<8xf32>
    %78 = vector.shape_cast %77 : vector<8xf32> to vector<8x1xf32>
    %cst_25 = arith.constant 6.250000e-02 : f32
    %79 = vector.broadcast %cst_25 : f32 to vector<8x1xf32>
    %80 = arith.mulf %78, %79 : vector<8x1xf32>
    %cst_26 = arith.constant dense<0xFF800000> : vector<8xf32>
    %81 = vector.multi_reduction <maximumf>, %72, %cst_26 [1] : vector<8x128xf32> to vector<8xf32>
    %82 = vector.shape_cast %81 : vector<8xf32> to vector<8x1xf32>
    %83 = vector.extract_strided_slice %3 {offsets = [0, 512], sizes = [8, 128], strides = [1, 1]} : vector<8x1024xf32> to vector<8x128xf32>
    %c8_i32_27 = arith.constant 8 : i32
    %84 = arith.muli %arg0, %c8_i32_27 : i32
    %c4_i32 = arith.constant 4 : i32
    %85 = arith.addi %84, %c4_i32 : i32
    %86 = arith.index_cast %85 : i32 to index
    %87 = memref.load %arg1[%86] : memref<8xf32, #tpu.memory_space<smem>>
    %88 = vector.broadcast %87 : f32 to vector<8x128xf32>
    %89 = arith.addf %83, %88 : vector<8x128xf32>
    %cst_28 = arith.constant 0xFF800000 : f32
    %90 = vector.broadcast %cst_28 : f32 to vector<8x128xf32>
    %91 = arith.select %6, %89, %90 : vector<8x128xi1>, vector<8x128xf32>
    %cst_29 = arith.constant 0.000000e+00 : f32
    %92 = vector.broadcast %cst_29 : f32 to vector<8x128xf32>
    %93 = arith.cmpf ogt, %91, %92 : vector<8x128xf32>
    %94 = arith.extui %93 : vector<8x128xi1> to vector<8x128xi32>
    %95 = arith.sitofp %94 : vector<8x128xi32> to vector<8x128xf32>
    %cst_30 = arith.constant dense<0.000000e+00> : vector<8xf32>
    %96 = vector.multi_reduction <add>, %95, %cst_30 [1] : vector<8x128xf32> to vector<8xf32>
    %97 = vector.shape_cast %96 : vector<8xf32> to vector<8x1xf32>
    %cst_31 = arith.constant 6.250000e-02 : f32
    %98 = vector.broadcast %cst_31 : f32 to vector<8x1xf32>
    %99 = arith.mulf %97, %98 : vector<8x1xf32>
    %cst_32 = arith.constant dense<0xFF800000> : vector<8xf32>
    %100 = vector.multi_reduction <maximumf>, %91, %cst_32 [1] : vector<8x128xf32> to vector<8xf32>
    %101 = vector.shape_cast %100 : vector<8xf32> to vector<8x1xf32>
    %102 = vector.extract_strided_slice %3 {offsets = [0, 640], sizes = [8, 128], strides = [1, 1]} : vector<8x1024xf32> to vector<8x128xf32>
    %c8_i32_33 = arith.constant 8 : i32
    %103 = arith.muli %arg0, %c8_i32_33 : i32
    %c5_i32 = arith.constant 5 : i32
    %104 = arith.addi %103, %c5_i32 : i32
    %105 = arith.index_cast %104 : i32 to index
    %106 = memref.load %arg1[%105] : memref<8xf32, #tpu.memory_space<smem>>
    %107 = vector.broadcast %106 : f32 to vector<8x128xf32>
    %108 = arith.addf %102, %107 : vector<8x128xf32>
    %cst_34 = arith.constant 0xFF800000 : f32
    %109 = vector.broadcast %cst_34 : f32 to vector<8x128xf32>
    %110 = arith.select %6, %108, %109 : vector<8x128xi1>, vector<8x128xf32>
    %cst_35 = arith.constant 0.000000e+00 : f32
    %111 = vector.broadcast %cst_35 : f32 to vector<8x128xf32>
    %112 = arith.cmpf ogt, %110, %111 : vector<8x128xf32>
    %113 = arith.extui %112 : vector<8x128xi1> to vector<8x128xi32>
    %114 = arith.sitofp %113 : vector<8x128xi32> to vector<8x128xf32>
    %cst_36 = arith.constant dense<0.000000e+00> : vector<8xf32>
    %115 = vector.multi_reduction <add>, %114, %cst_36 [1] : vector<8x128xf32> to vector<8xf32>
    %116 = vector.shape_cast %115 : vector<8xf32> to vector<8x1xf32>
    %cst_37 = arith.constant 6.250000e-02 : f32
    %117 = vector.broadcast %cst_37 : f32 to vector<8x1xf32>
    %118 = arith.mulf %116, %117 : vector<8x1xf32>
    %cst_38 = arith.constant dense<0xFF800000> : vector<8xf32>
    %119 = vector.multi_reduction <maximumf>, %110, %cst_38 [1] : vector<8x128xf32> to vector<8xf32>
    %120 = vector.shape_cast %119 : vector<8xf32> to vector<8x1xf32>
    %121 = vector.extract_strided_slice %3 {offsets = [0, 768], sizes = [8, 128], strides = [1, 1]} : vector<8x1024xf32> to vector<8x128xf32>
    %c8_i32_39 = arith.constant 8 : i32
    %122 = arith.muli %arg0, %c8_i32_39 : i32
    %c6_i32 = arith.constant 6 : i32
    %123 = arith.addi %122, %c6_i32 : i32
    %124 = arith.index_cast %123 : i32 to index
    %125 = memref.load %arg1[%124] : memref<8xf32, #tpu.memory_space<smem>>
    %126 = vector.broadcast %125 : f32 to vector<8x128xf32>
    %127 = arith.addf %121, %126 : vector<8x128xf32>
    %cst_40 = arith.constant 0xFF800000 : f32
    %128 = vector.broadcast %cst_40 : f32 to vector<8x128xf32>
    %129 = arith.select %6, %127, %128 : vector<8x128xi1>, vector<8x128xf32>
    %cst_41 = arith.constant 0.000000e+00 : f32
    %130 = vector.broadcast %cst_41 : f32 to vector<8x128xf32>
    %131 = arith.cmpf ogt, %129, %130 : vector<8x128xf32>
    %132 = arith.extui %131 : vector<8x128xi1> to vector<8x128xi32>
    %133 = arith.sitofp %132 : vector<8x128xi32> to vector<8x128xf32>
    %cst_42 = arith.constant dense<0.000000e+00> : vector<8xf32>
    %134 = vector.multi_reduction <add>, %133, %cst_42 [1] : vector<8x128xf32> to vector<8xf32>
    %135 = vector.shape_cast %134 : vector<8xf32> to vector<8x1xf32>
    %cst_43 = arith.constant 6.250000e-02 : f32
    %136 = vector.broadcast %cst_43 : f32 to vector<8x1xf32>
    %137 = arith.mulf %135, %136 : vector<8x1xf32>
    %cst_44 = arith.constant dense<0xFF800000> : vector<8xf32>
    %138 = vector.multi_reduction <maximumf>, %129, %cst_44 [1] : vector<8x128xf32> to vector<8xf32>
    %139 = vector.shape_cast %138 : vector<8xf32> to vector<8x1xf32>
    %140 = vector.extract_strided_slice %3 {offsets = [0, 896], sizes = [8, 128], strides = [1, 1]} : vector<8x1024xf32> to vector<8x128xf32>
    %c8_i32_45 = arith.constant 8 : i32
    %141 = arith.muli %arg0, %c8_i32_45 : i32
    %c7_i32 = arith.constant 7 : i32
    %142 = arith.addi %141, %c7_i32 : i32
    %143 = arith.index_cast %142 : i32 to index
    %144 = memref.load %arg1[%143] : memref<8xf32, #tpu.memory_space<smem>>
    %145 = vector.broadcast %144 : f32 to vector<8x128xf32>
    %146 = arith.addf %140, %145 : vector<8x128xf32>
    %cst_46 = arith.constant 0xFF800000 : f32
    %147 = vector.broadcast %cst_46 : f32 to vector<8x128xf32>
    %148 = arith.select %6, %146, %147 : vector<8x128xi1>, vector<8x128xf32>
    %cst_47 = arith.constant 0.000000e+00 : f32
    %149 = vector.broadcast %cst_47 : f32 to vector<8x128xf32>
    %150 = arith.cmpf ogt, %148, %149 : vector<8x128xf32>
    %151 = arith.extui %150 : vector<8x128xi1> to vector<8x128xi32>
    %152 = arith.sitofp %151 : vector<8x128xi32> to vector<8x128xf32>
    %cst_48 = arith.constant dense<0.000000e+00> : vector<8xf32>
    %153 = vector.multi_reduction <add>, %152, %cst_48 [1] : vector<8x128xf32> to vector<8xf32>
    %154 = vector.shape_cast %153 : vector<8xf32> to vector<8x1xf32>
    %cst_49 = arith.constant 6.250000e-02 : f32
    %155 = vector.broadcast %cst_49 : f32 to vector<8x1xf32>
    %156 = arith.mulf %154, %155 : vector<8x1xf32>
    %cst_50 = arith.constant dense<0xFF800000> : vector<8xf32>
    %157 = vector.multi_reduction <maximumf>, %148, %cst_50 [1] : vector<8x128xf32> to vector<8xf32>
    %158 = vector.shape_cast %157 : vector<8xf32> to vector<8x1xf32>
    %159 = tpu.concatenate %23, %42, %61, %80, %99, %118, %137, %156 in 1 : vector<8x1xf32>, vector<8x1xf32>, vector<8x1xf32>, vector<8x1xf32>, vector<8x1xf32>, vector<8x1xf32>, vector<8x1xf32>, vector<8x1xf32> -> vector<8x8xf32>
    %c0_51 = arith.constant 0 : index
    %c0_52 = arith.constant 0 : index
    %c0_53 = arith.constant 0 : index
    %160 = vector.load %arg4[%c0_51, %c0_52, %c0_53] : memref<1x8x8xf32, #tpu.memory_space<vmem>>, vector<1x8x8xf32>
    %161 = vector.shape_cast %160 : vector<1x8x8xf32> to vector<8x8xf32>
    %162 = vector.shape_cast %159 : vector<8x8xf32> to vector<1x8x8xf32>
    tpu.vector_store %arg4[%c0_51, %c0_52, %c0_53], %162 {strides = array<i32>} : memref<1x8x8xf32, #tpu.memory_space<vmem>>, vector<1x8x8xf32>,
    %163 = tpu.concatenate %25, %44, %63, %82, %101, %120, %139, %158 in 1 : vector<8x1xf32>, vector<8x1xf32>, vector<8x1xf32>, vector<8x1xf32>, vector<8x1xf32>, vector<8x1xf32>, vector<8x1xf32>, vector<8x1xf32> -> vector<8x8xf32>
    %c0_54 = arith.constant 0 : index
    %c0_55 = arith.constant 0 : index
    %c0_56 = arith.constant 0 : index
    %164 = vector.load %arg5[%c0_54, %c0_55, %c0_56] : memref<1x8x8xf32, #tpu.memory_space<vmem>>, vector<1x8x8xf32>
    %165 = vector.shape_cast %164 : vector<1x8x8xf32> to vector<8x8xf32>
    %166 = vector.shape_cast %163 : vector<8x8xf32> to vector<1x8x8xf32>
    tpu.vector_store %arg5[%c0_54, %c0_55, %c0_56], %166 {strides = array<i32>} : memref<1x8x8xf32, #tpu.memory_space<vmem>>, vector<1x8x8xf32>,
    return
  }
  func.func @transform_0(%arg0: i32) -> i32 {
    %c0_i32 = arith.constant 0 : i32
    %c0_i32_0 = arith.constant 0 : i32
    return %c0_i32 : i32
  }
  func.func @transform_1(%arg0: i32) -> (i32, i32) {
    %c0_i32 = arith.constant 0 : i32
    %c0_i32_0 = arith.constant 0 : i32
    %c0_i32_1 = arith.constant 0 : i32
    return %c0_i32, %c0_i32_0 : i32, i32
  }
  func.func @transform_2(%arg0: i32) -> (i32, i32, i32) {
    %c0_i32 = arith.constant 0 : i32
    %c0_i32_0 = arith.constant 0 : i32
    %c0_i32_1 = arith.constant 0 : i32
    return %arg0, %c0_i32, %c0_i32_0 : i32, i32, i32
  }
  func.func @transform_3(%arg0: i32) -> (i32, i32, i32) {
    %c0_i32 = arith.constant 0 : i32
    %c0_i32_0 = arith.constant 0 : i32
    %c0_i32_1 = arith.constant 0 : i32
    return %arg0, %c0_i32, %c0_i32_0 : i32, i32, i32
  }
  func.func @transform_4(%arg0: i32) -> (i32, i32, i32) {
    %c0_i32 = arith.constant 0 : i32
    %c0_i32_0 = arith.constant 0 : i32
    %c0_i32_1 = arith.constant 0 : i32
    return %arg0, %c0_i32, %c0_i32_0 : i32, i32, i32
  }
}

</mosaic_0001>

<llo_original>
// kernel: tpu_custom_call.1
$region0: #{tpu_custom_call.1}
  #allocation0 [shape = 'u32[]', space=smem, size = 0x4, offset = 0x4, fixed_abs, tag = 'smem constant byte address 0x4 - core index']
  #allocation1 [shape = 'u32[144,128]{1,0:T(1,128)}', space=vmem, size = 0x12000, scoped, tag = 'internal scratch']
  %s0 = inlined_call_operand.hbm [shape: f32[8], index: 0, kind: input, shape index: {}]
  %s1 = inlined_call_operand.hbm [shape: f32[8,128], index: 1, kind: input, shape index: {}]
  %s2 = inlined_call_operand.hbm [shape: f32[1,128,1024], index: 2, kind: input, shape index: {}]
  %s3 = inlined_call_operand.hbm [shape: f32[1,8,8], index: 3, kind: output, shape index: {0}]
  %s4 = inlined_call_operand.hbm [shape: f32[1,8,8], index: 4, kind: output, shape index: {1}]
  %5 = xla_tuple %s3, %s4
  %s6 = sld [smem:[#allocation0]]
  $region42: #{tpu_custom_call.1} parent=0
    _
  %s8 = ssub.s32 1, %s6
  %s9 = scalar_select 0, %s8, %s6
  $region1: #{tpu_custom_call.1} parent=0
    #allocation2 [shape = 'u8[512]{0}', space=smem, size = 0x200, scoped, tag = 'input window, operand 0, single buffered']
    #allocation3 [shape = 's32[1]{0}', space=sflag, size = 0x4, scoped, tag = 'scoped memory for tpu_custom_call.1']
    #allocation4 [shape = 's32[1]{0}', space=sflag, size = 0x4, scoped, tag = 'scoped memory for tpu_custom_call.1']
    #allocation5 [shape = 's32[1]{0}', space=sflag, size = 0x4, scoped, tag = 'scoped memory for tpu_custom_call.1']
    #allocation6 [shape = 'u8[4096]{0}', space=vmem, size = 0x1000, scoped, tag = 'input window, operand 1, single buffered']
    #allocation7 [shape = 'u8[524288]{0}', space=vmem, size = 0x80000, scoped, tag = 'input window, operand 2, single buffered']
    #allocation8 [shape = 's32[1]{0}', space=sflag, size = 0x4, scoped, tag = 'scoped memory for tpu_custom_call.1']
    #allocation9 [shape = 'u8[4096]{0}', space=vmem, size = 0x1000, scoped, tag = 'output window, operand 0, single buffered']
    #allocation10 [shape = 'u8[4096]{0}', space=vmem, size = 0x1000, scoped, tag = 'output window, operand 1, single buffered']
    #allocation11 [shape = 's32[1]{0}', space=sflag, size = 0x4, scoped, tag = 'scoped memory for tpu_custom_call.1']
    %10 = vsyncpa [#allocation5], 0
    %11 = vsyncpa [#allocation3], 0
    %12 = vsyncpa [#allocation8], 0
    %13 = vsyncpa [#allocation4], 0
    %14 = vsyncpa [#allocation11], 0
    // Predicated region
    $region2: #{tpu_custom_call.1} parent=1 // pred_check
      _
    $region3: #{tpu_custom_call.1} parent=1 // pred_check_branch
      %16 = sbr.rel (0) target = $region5
    $region4: #{tpu_custom_call.1} parent=1 // pred_region
      %s18 = ssub.s32 16, 16
      %19 = vsyncadd [#allocation5], %s18
      %22 = dma.hbm_to_smem %s0, 16, [#allocation2], [#allocation5]
    $region5: #{tpu_custom_call.1} parent=1 // pred_fallthru
      _
    // Predicated region
    $region6: #{tpu_custom_call.1} parent=1 // pred_check
      _
    $region7: #{tpu_custom_call.1} parent=1 // pred_check_branch
      %24 = sbr.rel (0) target = $region9
    $region8: #{tpu_custom_call.1} parent=1 // pred_region
      %s26 = ssub.s32 128, 128
      %27 = vsyncadd [#allocation3], %s26
      %s29 = sshll.u32 [#allocation6], 4
      %s30 = int_to_ptr.vmem [resolvable:$true] %s29
      %32 = dma.hbm_to_vmem [thread:$0]  %s1, 128, %s30, [#allocation3]
    $region9: #{tpu_custom_call.1} parent=1 // pred_fallthru
      _
    // Predicated region
    $region10: #{tpu_custom_call.1} parent=1 // pred_check
      _
    $region11: #{tpu_custom_call.1} parent=1 // pred_check_branch
      %34 = sbr.rel (0) target = $region13
    $region12: #{tpu_custom_call.1} parent=1 // pred_region
      %s36 = ssub.s32 16384, 16384
      %37 = vsyncadd [#allocation8], %s36
      %s38 = sshll.u32 [#allocation7], 4
      %s39 = int_to_ptr.vmem [resolvable:$true] %s38
      %44 = dma.hbm_to_vmem [thread:$0]  %s2, 16384, %s39, [#allocation8], 1024, 1024, 64
    $region13: #{tpu_custom_call.1} parent=1 // pred_fallthru
      _
    // Predicated region
    $region14: #{tpu_custom_call.1} parent=1 // pred_check
      _
    $region15: #{tpu_custom_call.1} parent=1 // pred_check_branch
      %46 = sbr.rel (0) target = $region17
    $region16: #{tpu_custom_call.1} parent=1 // pred_region
      %47 = dma.done [#allocation5], 16
    $region17: #{tpu_custom_call.1} parent=1 // pred_fallthru
      _
    // Predicated region
    $region18: #{tpu_custom_call.1} parent=1 // pred_check
      _
    $region19: #{tpu_custom_call.1} parent=1 // pred_check_branch
      %49 = sbr.rel (0) target = $region21
    $region20: #{tpu_custom_call.1} parent=1 // pred_region
      %50 = dma.done [#allocation3], 128
    $region21: #{tpu_custom_call.1} parent=1 // pred_fallthru
      _
    // Predicated region
    $region22: #{tpu_custom_call.1} parent=1 // pred_check
      _
    $region23: #{tpu_custom_call.1} parent=1 // pred_check_branch
      %52 = sbr.rel (0) target = $region25
    $region24: #{tpu_custom_call.1} parent=1 // pred_region
      %53 = dma.done [#allocation8], 16384
    $region25: #{tpu_custom_call.1} parent=1 // pred_fallthru
      _
    %54 = sfence
    %v55 = vld [vmem:[#allocation6] sm:$0xff]
    %v56 = vld [vmem:[#allocation7] sm:$0xff]
    %v57 = vld [vmem:[#allocation7 + $0x8] sm:$0xff]
    %v58 = vld [vmem:[#allocation7 + $0x10] sm:$0xff]
    %v59 = vld [vmem:[#allocation7 + $0x18] sm:$0xff]
    %v60 = vld [vmem:[#allocation7 + $0x20] sm:$0xff]
    %v61 = vld [vmem:[#allocation7 + $0x28] sm:$0xff]
    %v62 = vld [vmem:[#allocation7 + $0x30] sm:$0xff]
    %v63 = vld [vmem:[#allocation7 + $0x38] sm:$0xff]
    %v64 = vld [vmem:[#allocation7 + $0x40] sm:$0xff]
    %v65 = vld [vmem:[#allocation7 + $0x48] sm:$0xff]
    %v66 = vld [vmem:[#allocation7 + $0x50] sm:$0xff]
    %v67 = vld [vmem:[#allocation7 + $0x58] sm:$0xff]
    %v68 = vld [vmem:[#allocation7 + $0x60] sm:$0xff]
    %v69 = vld [vmem:[#allocation7 + $0x68] sm:$0xff]
    %v70 = vld [vmem:[#allocation7 + $0x70] sm:$0xff]
    %v71 = vld [vmem:[#allocation7 + $0x78] sm:$0xff]
    %v72 = vld [vmem:[#allocation7 + $0x80] sm:$0xff]
    %v73 = vld [vmem:[#allocation7 + $0x88] sm:$0xff]
    %v74 = vld [vmem:[#allocation7 + $0x90] sm:$0xff]
    %v75 = vld [vmem:[#allocation7 + $0x98] sm:$0xff]
    %v76 = vld [vmem:[#allocation7 + $0xa0] sm:$0xff]
    %v77 = vld [vmem:[#allocation7 + $0xa8] sm:$0xff]
    %v78 = vld [vmem:[#allocation7 + $0xb0] sm:$0xff]
    %v79 = vld [vmem:[#allocation7 + $0xb8] sm:$0xff]
    %v80 = vld [vmem:[#allocation7 + $0xc0] sm:$0xff]
    %v81 = vld [vmem:[#allocation7 + $0xc8] sm:$0xff]
    %v82 = vld [vmem:[#allocation7 + $0xd0] sm:$0xff]
    %v83 = vld [vmem:[#allocation7 + $0xd8] sm:$0xff]
    %v84 = vld [vmem:[#allocation7 + $0xe0] sm:$0xff]
    %v85 = vld [vmem:[#allocation7 + $0xe8] sm:$0xff]
    %v86 = vld [vmem:[#allocation7 + $0xf0] sm:$0xff]
    %v87 = vld [vmem:[#allocation7 + $0xf8] sm:$0xff]
    %v88 = vld [vmem:[#allocation7 + $0x100] sm:$0xff]
    %v89 = vld [vmem:[#allocation7 + $0x108] sm:$0xff]
    %v90 = vld [vmem:[#allocation7 + $0x110] sm:$0xff]
    %v91 = vld [vmem:[#allocation7 + $0x118] sm:$0xff]
    %v92 = vld [vmem:[#allocation7 + $0x120] sm:$0xff]
    %v93 = vld [vmem:[#allocation7 + $0x128] sm:$0xff]
    %v94 = vld [vmem:[#allocation7 + $0x130] sm:$0xff]
    %v95 = vld [vmem:[#allocation7 + $0x138] sm:$0xff]
    %v96 = vld [vmem:[#allocation7 + $0x140] sm:$0xff]
    %v97 = vld [vmem:[#allocation7 + $0x148] sm:$0xff]
    %v98 = vld [vmem:[#allocation7 + $0x150] sm:$0xff]
    %v99 = vld [vmem:[#allocation7 + $0x158] sm:$0xff]
    %v100 = vld [vmem:[#allocation7 + $0x160] sm:$0xff]
    %v101 = vld [vmem:[#allocation7 + $0x168] sm:$0xff]
    %v102 = vld [vmem:[#allocation7 + $0x170] sm:$0xff]
    %v103 = vld [vmem:[#allocation7 + $0x178] sm:$0xff]
    %v104 = vld [vmem:[#allocation7 + $0x180] sm:$0xff]
    %v105 = vld [vmem:[#allocation7 + $0x188] sm:$0xff]
    %v106 = vld [vmem:[#allocation7 + $0x190] sm:$0xff]
    %v107 = vld [vmem:[#allocation7 + $0x198] sm:$0xff]
    %v108 = vld [vmem:[#allocation7 + $0x1a0] sm:$0xff]
    %v109 = vld [vmem:[#allocation7 + $0x1a8] sm:$0xff]
    %v110 = vld [vmem:[#allocation7 + $0x1b0] sm:$0xff]
    %v111 = vld [vmem:[#allocation7 + $0x1b8] sm:$0xff]
    %v112 = vld [vmem:[#allocation7 + $0x1c0] sm:$0xff]
    %v113 = vld [vmem:[#allocation7 + $0x1c8] sm:$0xff]
    %v114 = vld [vmem:[#allocation7 + $0x1d0] sm:$0xff]
    %v115 = vld [vmem:[#allocation7 + $0x1d8] sm:$0xff]
    %v116 = vld [vmem:[#allocation7 + $0x1e0] sm:$0xff]
    %v117 = vld [vmem:[#allocation7 + $0x1e8] sm:$0xff]
    %v118 = vld [vmem:[#allocation7 + $0x1f0] sm:$0xff]
    %v119 = vld [vmem:[#allocation7 + $0x1f8] sm:$0xff]
    %v120 = vld [vmem:[#allocation7 + $0x200] sm:$0xff]
    %v121 = vld [vmem:[#allocation7 + $0x208] sm:$0xff]
    %v122 = vld [vmem:[#allocation7 + $0x210] sm:$0xff]
    %v123 = vld [vmem:[#allocation7 + $0x218] sm:$0xff]
    %v124 = vld [vmem:[#allocation7 + $0x220] sm:$0xff]
    %v125 = vld [vmem:[#allocation7 + $0x228] sm:$0xff]
    %v126 = vld [vmem:[#allocation7 + $0x230] sm:$0xff]
    %v127 = vld [vmem:[#allocation7 + $0x238] sm:$0xff]
    %v128 = vld [vmem:[#allocation7 + $0x240] sm:$0xff]
    %v129 = vld [vmem:[#allocation7 + $0x248] sm:$0xff]
    %v130 = vld [vmem:[#allocation7 + $0x250] sm:$0xff]
    %v131 = vld [vmem:[#allocation7 + $0x258] sm:$0xff]
    %v132 = vld [vmem:[#allocation7 + $0x260] sm:$0xff]
    %v133 = vld [vmem:[#allocation7 + $0x268] sm:$0xff]
    %v134 = vld [vmem:[#allocation7 + $0x270] sm:$0xff]
    %v135 = vld [vmem:[#allocation7 + $0x278] sm:$0xff]
    %v136 = vld [vmem:[#allocation7 + $0x280] sm:$0xff]
    %v137 = vld [vmem:[#allocation7 + $0x288] sm:$0xff]
    %v138 = vld [vmem:[#allocation7 + $0x290] sm:$0xff]
    %v139 = vld [vmem:[#allocation7 + $0x298] sm:$0xff]
    %v140 = vld [vmem:[#allocation7 + $0x2a0] sm:$0xff]
    %v141 = vld [vmem:[#allocation7 + $0x2a8] sm:$0xff]
    %v142 = vld [vmem:[#allocation7 + $0x2b0] sm:$0xff]
    %v143 = vld [vmem:[#allocation7 + $0x2b8] sm:$0xff]
    %v144 = vld [vmem:[#allocation7 + $0x2c0] sm:$0xff]
    %v145 = vld [vmem:[#allocation7 + $0x2c8] sm:$0xff]
    %v146 = vld [vmem:[#allocation7 + $0x2d0] sm:$0xff]
    %v147 = vld [vmem:[#allocation7 + $0x2d8] sm:$0xff]
    %v148 = vld [vmem:[#allocation7 + $0x2e0] sm:$0xff]
    %v149 = vld [vmem:[#allocation7 + $0x2e8] sm:$0xff]
    %v150 = vld [vmem:[#allocation7 + $0x2f0] sm:$0xff]
    %v151 = vld [vmem:[#allocation7 + $0x2f8] sm:$0xff]
    %v152 = vld [vmem:[#allocation7 + $0x300] sm:$0xff]
    %v153 = vld [vmem:[#allocation7 + $0x308] sm:$0xff]
    %v154 = vld [vmem:[#allocation7 + $0x310] sm:$0xff]
    %v155 = vld [vmem:[#allocation7 + $0x318] sm:$0xff]
    %v156 = vld [vmem:[#allocation7 + $0x320] sm:$0xff]
    %v157 = vld [vmem:[#allocation7 + $0x328] sm:$0xff]
    %v158 = vld [vmem:[#allocation7 + $0x330] sm:$0xff]
    %v159 = vld [vmem:[#allocation7 + $0x338] sm:$0xff]
    %v160 = vld [vmem:[#allocation7 + $0x340] sm:$0xff]
    %v161 = vld [vmem:[#allocation7 + $0x348] sm:$0xff]
    %v162 = vld [vmem:[#allocation7 + $0x350] sm:$0xff]
    %v163 = vld [vmem:[#allocation7 + $0x358] sm:$0xff]
    %v164 = vld [vmem:[#allocation7 + $0x360] sm:$0xff]
    %v165 = vld [vmem:[#allocation7 + $0x368] sm:$0xff]
    %v166 = vld [vmem:[#allocation7 + $0x370] sm:$0xff]
    %v167 = vld [vmem:[#allocation7 + $0x378] sm:$0xff]
    %v168 = vld [vmem:[#allocation7 + $0x380] sm:$0xff]
    %v169 = vld [vmem:[#allocation7 + $0x388] sm:$0xff]
    %v170 = vld [vmem:[#allocation7 + $0x390] sm:$0xff]
    %v171 = vld [vmem:[#allocation7 + $0x398] sm:$0xff]
    %v172 = vld [vmem:[#allocation7 + $0x3a0] sm:$0xff]
    %v173 = vld [vmem:[#allocation7 + $0x3a8] sm:$0xff]
    %v174 = vld [vmem:[#allocation7 + $0x3b0] sm:$0xff]
    %v175 = vld [vmem:[#allocation7 + $0x3b8] sm:$0xff]
    %v176 = vld [vmem:[#allocation7 + $0x3c0] sm:$0xff]
    %v177 = vld [vmem:[#allocation7 + $0x3c8] sm:$0xff]
    %v178 = vld [vmem:[#allocation7 + $0x3d0] sm:$0xff]
    %v179 = vld [vmem:[#allocation7 + $0x3d8] sm:$0xff]
    %v180 = vld [vmem:[#allocation7 + $0x3e0] sm:$0xff]
    %v181 = vld [vmem:[#allocation7 + $0x3e8] sm:$0xff]
    %v182 = vld [vmem:[#allocation7 + $0x3f0] sm:$0xff]
    %v183 = vld [vmem:[#allocation7 + $0x3f8] sm:$0xff]
    %184 = vmatprep.subr.mxu0 %v57
    %185 = vmatpush1.msra.mxu0 %v56
    %186 = vmatprep.subr.mxu0 %v65
    %187 = vmatpush1.msra.mxu0 %v64
    %188 = vmatprep.subr.mxu0 %v73
    %189 = vmatpush1.msra.mxu0 %v72
    %190 = vmatprep.subr.mxu0 %v81
    %191 = vmatpush1.msra.mxu0 %v80
    %192 = vmatprep.subr.mxu0 %v89
    %193 = vmatpush1.msra.mxu0 %v88
    %194 = vmatprep.subr.mxu0 %v97
    %195 = vmatpush1.msra.mxu0 %v96
    %196 = vmatprep.subr.mxu0 %v105
    %197 = vmatpush1.msra.mxu0 %v104
    %198 = vmatprep.subr.mxu0 %v113
    %199 = vmatpush1.msra.mxu0 %v112
    %200 = vmatprep.subr.mxu0 %v121
    %201 = vmatpush1.msra.mxu0 %v120
    %202 = vmatprep.subr.mxu0 %v129
    %203 = vmatpush1.msra.mxu0 %v128
    %204 = vmatprep.subr.mxu0 %v137
    %205 = vmatpush1.msra.mxu0 %v136
    %206 = vmatprep.subr.mxu0 %v145
    %207 = vmatpush1.msra.mxu0 %v144
    %208 = vmatprep.subr.mxu0 %v153
    %209 = vmatpush1.msra.mxu0 %v152
    %210 = vmatprep.subr.mxu0 %v161
    %211 = vmatpush1.msra.mxu0 %v160
    %212 = vmatprep.subr.mxu0 %v169
    %213 = vmatpush1.msra.mxu0 %v168
    %214 = vmatprep.subr.mxu0 %v177
    %215 = vmatpush1.msra.mxu0 %v176
    %216 = vmatprep.subr.mxu0 0.0
    %217 = vmatpush1.msra.mxu0 0.0
    %218 = vmatprep.subr.mxu0 0.0
    %219 = vmatpush1.msra.mxu0 0.0
    %220 = vmatprep.subr.mxu0 0.0
    %221 = vmatpush1.msra.mxu0 0.0
    %222 = vmatprep.subr.mxu0 0.0
    %223 = vmatpush1.msra.mxu0 0.0
    %224 = vmatprep.subr.mxu0 0.0
    %225 = vmatpush1.msra.mxu0 0.0
    %226 = vmatprep.subr.mxu0 0.0
    %227 = vmatpush1.msra.mxu0 0.0
    %228 = vmatprep.subr.mxu0 0.0
    %229 = vmatpush1.msra.mxu0 0.0
    %230 = vmatprep.subr.mxu0 0.0
    %231 = vmatpush1.msra.mxu0 0.0
    %232 = vmatprep.subr.mxu0 0.0
    %233 = vmatpush1.msra.mxu0 0.0
    %234 = vmatprep.subr.mxu0 0.0
    %235 = vmatpush1.msra.mxu0 0.0
    %236 = vmatprep.subr.mxu0 0.0
    %237 = vmatpush1.msra.mxu0 0.0
    %238 = vmatprep.subr.mxu0 0.0
    %239 = vmatpush1.msra.mxu0 0.0
    %240 = vmatprep.subr.mxu0 0.0
    %241 = vmatpush1.msra.mxu0 0.0
    %242 = vmatprep.subr.mxu0 0.0
    %243 = vmatpush1.msra.mxu0 0.0
    %244 = vmatprep.subr.mxu0 0.0
    %245 = vmatpush1.msra.mxu0 0.0
    %246 = vmatprep.subr.mxu0 0.0
    %247 = vmatpush1.msra.mxu0 0.0
    %248 = vmatprep.mubr.f32.mxu0 0.0
    %249 = vmatmul.mubr.f32.gmra.mrb[0].mxu0 %v55
    %v250 = vpop.f32.mrb[0].mxu0
    %v251 = vadd.f32 0.0, %v250
    %v252 = vpop.f32.mrb[0].mxu0
    %v253 = vadd.f32 0.0, %v252
    %254 = vdwg.mxu0
    %255 = vmatprep.subr.mxu0 %v59
    %256 = vmatpush1.msra.mxu0 %v58
    %257 = vmatprep.subr.mxu0 %v67
    %258 = vmatpush1.msra.mxu0 %v66
    %259 = vmatprep.subr.mxu0 %v75
    %260 = vmatpush1.msra.mxu0 %v74
    %261 = vmatprep.subr.mxu0 %v83
    %262 = vmatpush1.msra.mxu0 %v82
    %263 = vmatprep.subr.mxu0 %v91
    %264 = vmatpush1.msra.mxu0 %v90
    %265 = vmatprep.subr.mxu0 %v99
    %266 = vmatpush1.msra.mxu0 %v98
    %267 = vmatprep.subr.mxu0 %v107
    %268 = vmatpush1.msra.mxu0 %v106
    %269 = vmatprep.subr.mxu0 %v115
    %270 = vmatpush1.msra.mxu0 %v114
    %271 = vmatprep.subr.mxu0 %v123
    %272 = vmatpush1.msra.mxu0 %v122
    %273 = vmatprep.subr.mxu0 %v131
    %274 = vmatpush1.msra.mxu0 %v130
    %275 = vmatprep.subr.mxu0 %v139
    %276 = vmatpush1.msra.mxu0 %v138
    %277 = vmatprep.subr.mxu0 %v147
    %278 = vmatpush1.msra.mxu0 %v146
    %279 = vmatprep.subr.mxu0 %v155
    %280 = vmatpush1.msra.mxu0 %v154
    %281 = vmatprep.subr.mxu0 %v163
    %282 = vmatpush1.msra.mxu0 %v162
    %283 = vmatprep.subr.mxu0 %v171
    %284 = vmatpush1.msra.mxu0 %v170
    %285 = vmatprep.subr.mxu0 %v179
    %286 = vmatpush1.msra.mxu0 %v178
    %287 = vmatprep.subr.mxu0 0.0
    %288 = vmatpush1.msra.mxu0 0.0
    %289 = vmatprep.subr.mxu0 0.0
    %290 = vmatpush1.msra.mxu0 0.0
    %291 = vmatprep.subr.mxu0 0.0
    %292 = vmatpush1.msra.mxu0 0.0
    %293 = vmatprep.subr.mxu0 0.0
    %294 = vmatpush1.msra.mxu0 0.0
    %295 = vmatprep.subr.mxu0 0.0
    %296 = vmatpush1.msra.mxu0 0.0
    %297 = vmatprep.subr.mxu0 0.0
    %298 = vmatpush1.msra.mxu0 0.0
    %299 = vmatprep.subr.mxu0 0.0
    %300 = vmatpush1.msra.mxu0 0.0
    %301 = vmatprep.subr.mxu0 0.0
    %302 = vmatpush1.msra.mxu0 0.0
    %303 = vmatprep.subr.mxu0 0.0
    %304 = vmatpush1.msra.mxu0 0.0
    %305 = vmatprep.subr.mxu0 0.0
    %306 = vmatpush1.msra.mxu0 0.0
    %307 = vmatprep.subr.mxu0 0.0
    %308 = vmatpush1.msra.mxu0 0.0
    %309 = vmatprep.subr.mxu0 0.0
    %310 = vmatpush1.msra.mxu0 0.0
    %311 = vmatprep.subr.mxu0 0.0
    %312 = vmatpush1.msra.mxu0 0.0
    %313 = vmatprep.subr.mxu0 0.0
    %314 = vmatpush1.msra.mxu0 0.0
    %315 = vmatprep.subr.mxu0 0.0
    %316 = vmatpush1.msra.mxu0 0.0
    %317 = vmatprep.subr.mxu0 0.0
    %318 = vmatpush1.msra.mxu0 0.0
    %319 = vmatprep.mubr.f32.mxu0 0.0
    %320 = vmatmul.mubr.f32.gmra.mrb[0].mxu0 %v55
    %v321 = vpop.f32.mrb[0].mxu0
    %v322 = vadd.f32 0.0, %v321
    %v323 = vpop.f32.mrb[0].mxu0
    %v324 = vadd.f32 0.0, %v323
    %325 = vdwg.mxu0
    %326 = vmatprep.subr.mxu0 %v61
    %327 = vmatpush1.msra.mxu0 %v60
    %328 = vmatprep.subr.mxu0 %v69
    %329 = vmatpush1.msra.mxu0 %v68
    %330 = vmatprep.subr.mxu0 %v77
    %331 = vmatpush1.msra.mxu0 %v76
    %332 = vmatprep.subr.mxu0 %v85
    %333 = vmatpush1.msra.mxu0 %v84
    %334 = vmatprep.subr.mxu0 %v93
    %335 = vmatpush1.msra.mxu0 %v92
    %336 = vmatprep.subr.mxu0 %v101
    %337 = vmatpush1.msra.mxu0 %v100
    %338 = vmatprep.subr.mxu0 %v109
    %339 = vmatpush1.msra.mxu0 %v108
    %340 = vmatprep.subr.mxu0 %v117
    %341 = vmatpush1.msra.mxu0 %v116
    %342 = vmatprep.subr.mxu0 %v125
    %343 = vmatpush1.msra.mxu0 %v124
    %344 = vmatprep.subr.mxu0 %v133
    %345 = vmatpush1.msra.mxu0 %v132
    %346 = vmatprep.subr.mxu0 %v141
    %347 = vmatpush1.msra.mxu0 %v140
    %348 = vmatprep.subr.mxu0 %v149
    %349 = vmatpush1.msra.mxu0 %v148
    %350 = vmatprep.subr.mxu0 %v157
    %351 = vmatpush1.msra.mxu0 %v156
    %352 = vmatprep.subr.mxu0 %v165
    %353 = vmatpush1.msra.mxu0 %v164
    %354 = vmatprep.subr.mxu0 %v173
    %355 = vmatpush1.msra.mxu0 %v172
    %356 = vmatprep.subr.mxu0 %v181
    %357 = vmatpush1.msra.mxu0 %v180
    %358 = vmatprep.subr.mxu0 0.0
    %359 = vmatpush1.msra.mxu0 0.0
    %360 = vmatprep.subr.mxu0 0.0
    %361 = vmatpush1.msra.mxu0 0.0
    %362 = vmatprep.subr.mxu0 0.0
    %363 = vmatpush1.msra.mxu0 0.0
    %364 = vmatprep.subr.mxu0 0.0
    %365 = vmatpush1.msra.mxu0 0.0
    %366 = vmatprep.subr.mxu0 0.0
    %367 = vmatpush1.msra.mxu0 0.0
    %368 = vmatprep.subr.mxu0 0.0
    %369 = vmatpush1.msra.mxu0 0.0
    %370 = vmatprep.subr.mxu0 0.0
    %371 = vmatpush1.msra.mxu0 0.0
    %372 = vmatprep.subr.mxu0 0.0
    %373 = vmatpush1.msra.mxu0 0.0
    %374 = vmatprep.subr.mxu0 0.0
    %375 = vmatpush1.msra.mxu0 0.0
    %376 = vmatprep.subr.mxu0 0.0
    %377 = vmatpush1.msra.mxu0 0.0
    %378 = vmatprep.subr.mxu0 0.0
    %379 = vmatpush1.msra.mxu0 0.0
    %380 = vmatprep.subr.mxu0 0.0
    %381 = vmatpush1.msra.mxu0 0.0
    %382 = vmatprep.subr.mxu0 0.0
    %383 = vmatpush1.msra.mxu0 0.0
    %384 = vmatprep.subr.mxu0 0.0
    %385 = vmatpush1.msra.mxu0 0.0
    %386 = vmatprep.subr.mxu0 0.0
    %387 = vmatpush1.msra.mxu0 0.0
    %388 = vmatprep.subr.mxu0 0.0
    %389 = vmatpush1.msra.mxu0 0.0
    %390 = vmatprep.mubr.f32.mxu0 0.0
    %391 = vmatmul.mubr.f32.gmra.mrb[0].mxu0 %v55
    %v392 = vpop.f32.mrb[0].mxu0
    %v393 = vadd.f32 0.0, %v392
    %v394 = vpop.f32.mrb[0].mxu0
    %v395 = vadd.f32 0.0, %v394
    %396 = vdwg.mxu0
    %397 = vmatprep.subr.mxu0 %v63
    %398 = vmatpush1.msra.mxu0 %v62
    %399 = vmatprep.subr.mxu0 %v71
    %400 = vmatpush1.msra.mxu0 %v70
    %401 = vmatprep.subr.mxu0 %v79
    %402 = vmatpush1.msra.mxu0 %v78
    %403 = vmatprep.subr.mxu0 %v87
    %404 = vmatpush1.msra.mxu0 %v86
    %405 = vmatprep.subr.mxu0 %v95
    %406 = vmatpush1.msra.mxu0 %v94
    %407 = vmatprep.subr.mxu0 %v103
    %408 = vmatpush1.msra.mxu0 %v102
    %409 = vmatprep.subr.mxu0 %v111
    %410 = vmatpush1.msra.mxu0 %v110
    %411 = vmatprep.subr.mxu0 %v119
    %412 = vmatpush1.msra.mxu0 %v118
    %413 = vmatprep.subr.mxu0 %v127
    %414 = vmatpush1.msra.mxu0 %v126
    %415 = vmatprep.subr.mxu0 %v135
    %416 = vmatpush1.msra.mxu0 %v134
    %417 = vmatprep.subr.mxu0 %v143
    %418 = vmatpush1.msra.mxu0 %v142
    %419 = vmatprep.subr.mxu0 %v151
    %420 = vmatpush1.msra.mxu0 %v150
    %421 = vmatprep.subr.mxu0 %v159
    %422 = vmatpush1.msra.mxu0 %v158
    %423 = vmatprep.subr.mxu0 %v167
    %424 = vmatpush1.msra.mxu0 %v166
    %425 = vmatprep.subr.mxu0 %v175
    %426 = vmatpush1.msra.mxu0 %v174
    %427 = vmatprep.subr.mxu0 %v183
    %428 = vmatpush1.msra.mxu0 %v182
    %429 = vmatprep.subr.mxu0 0.0
    %430 = vmatpush1.msra.mxu0 0.0
    %431 = vmatprep.subr.mxu0 0.0
    %432 = vmatpush1.msra.mxu0 0.0
    %433 = vmatprep.subr.mxu0 0.0
    %434 = vmatpush1.msra.mxu0 0.0
    %435 = vmatprep.subr.mxu0 0.0
    %436 = vmatpush1.msra.mxu0 0.0
    %437 = vmatprep.subr.mxu0 0.0
    %438 = vmatpush1.msra.mxu0 0.0
    %439 = vmatprep.subr.mxu0 0.0
    %440 = vmatpush1.msra.mxu0 0.0
    %441 = vmatprep.subr.mxu0 0.0
    %442 = vmatpush1.msra.mxu0 0.0
    %443 = vmatprep.subr.mxu0 0.0
    %444 = vmatpush1.msra.mxu0 0.0
    %445 = vmatprep.subr.mxu0 0.0
    %446 = vmatpush1.msra.mxu0 0.0
    %447 = vmatprep.subr.mxu0 0.0
    %448 = vmatpush1.msra.mxu0 0.0
    %449 = vmatprep.subr.mxu0 0.0
    %450 = vmatpush1.msra.mxu0 0.0
    %451 = vmatprep.subr.mxu0 0.0
    %452 = vmatpush1.msra.mxu0 0.0
    %453 = vmatprep.subr.mxu0 0.0
    %454 = vmatpush1.msra.mxu0 0.0
    %455 = vmatprep.subr.mxu0 0.0
    %456 = vmatpush1.msra.mxu0 0.0
    %457 = vmatprep.subr.mxu0 0.0
    %458 = vmatpush1.msra.mxu0 0.0
    %459 = vmatprep.subr.mxu0 0.0
    %460 = vmatpush1.msra.mxu0 0.0
    %461 = vmatprep.mubr.f32.mxu0 0.0
    %462 = vmatmul.mubr.f32.gmra.mrb[0].mxu0 %v55
    %v463 = vpop.f32.mrb[0].mxu0
    %v464 = vadd.f32 0.0, %v463
    %v465 = vpop.f32.mrb[0].mxu0
    %v466 = vadd.f32 0.0, %v465
    %467 = vdwg.mxu0
    %v468 = vlaneseq
    %v469 = vand.u32 %v468, 127
    %vm470 = vcmp.lt.s32.totalorder %v469, 16
    %s471 = smul.u32 0, 8
    %s472 = sld [smem:[#allocation2 + %s471]]
    %v473 = vstv %s472
    %v474 = vadd.f32 %v251, %v473
    %v475 = vsel %vm470, %v474, -inf
    %vm476 = vcmp.gt.f32.partialorder %v475, 0.0
    %v477 = vsel %vm476, 1, 0
    %v478 = vcvt.s32.f32 %v477
    %479 = vadd.xlane.f32.xlu0 %v478
    %v480 = vpop.xlane.xlu0 %479
    %v481 = vmul.f32 %v480, 0.0625
    %482 = vmax.xlane.f32.xlu0 %v475
    %v483 = vpop.xlane.xlu0 %482
    %s484 = sadd.s32 %s471, 1
    %s485 = sld [smem:[#allocation2 + %s484]]
    %v486 = vstv %s485
    %v487 = vadd.f32 %v253, %v486
    %v488 = vsel %vm470, %v487, -inf
    %vm489 = vcmp.gt.f32.partialorder %v488, 0.0
    %v490 = vsel %vm489, 1, 0
    %v491 = vcvt.s32.f32 %v490
    %492 = vadd.xlane.f32.xlu0 %v491
    %v493 = vpop.xlane.xlu0 %492
    %v494 = vmul.f32 %v493, 0.0625
    %495 = vmax.xlane.f32.xlu0 %v488
    %v496 = vpop.xlane.xlu0 %495
    %s497 = sadd.s32 %s471, 2
    %s498 = sld [smem:[#allocation2 + %s497]]
    %v499 = vstv %s498
    %v500 = vadd.f32 %v322, %v499
    %v501 = vsel %vm470, %v500, -inf
    %vm502 = vcmp.gt.f32.partialorder %v501, 0.0
    %v503 = vsel %vm502, 1, 0
    %v504 = vcvt.s32.f32 %v503
    %505 = vadd.xlane.f32.xlu0 %v504
    %v506 = vpop.xlane.xlu0 %505
    %v507 = vmul.f32 %v506, 0.0625
    %508 = vmax.xlane.f32.xlu0 %v501
    %v509 = vpop.xlane.xlu0 %508
    %s510 = sadd.s32 %s471, 3
    %s511 = sld [smem:[#allocation2 + %s510]]
    %v512 = vstv %s511
    %v513 = vadd.f32 %v324, %v512
    %v514 = vsel %vm470, %v513, -inf
    %vm515 = vcmp.gt.f32.partialorder %v514, 0.0
    %v516 = vsel %vm515, 1, 0
    %v517 = vcvt.s32.f32 %v516
    %518 = vadd.xlane.f32.xlu0 %v517
    %v519 = vpop.xlane.xlu0 %518
    %v520 = vmul.f32 %v519, 0.0625
    %521 = vmax.xlane.f32.xlu0 %v514
    %v522 = vpop.xlane.xlu0 %521
    %s523 = sadd.s32 %s471, 4
    %s524 = sld [smem:[#allocation2 + %s523]]
    %v525 = vstv %s524
    %v526 = vadd.f32 %v393, %v525
    %v527 = vsel %vm470, %v526, -inf
    %vm528 = vcmp.gt.f32.partialorder %v527, 0.0
    %v529 = vsel %vm528, 1, 0
    %v530 = vcvt.s32.f32 %v529
    %531 = vadd.xlane.f32.xlu0 %v530
    %v532 = vpop.xlane.xlu0 %531
    %v533 = vmul.f32 %v532, 0.0625
    %534 = vmax.xlane.f32.xlu0 %v527
    %v535 = vpop.xlane.xlu0 %534
    %s536 = sadd.s32 %s471, 5
    %s537 = sld [smem:[#allocation2 + %s536]]
    %v538 = vstv %s537
    %v539 = vadd.f32 %v395, %v538
    %v540 = vsel %vm470, %v539, -inf
    %vm541 = vcmp.gt.f32.partialorder %v540, 0.0
    %v542 = vsel %vm541, 1, 0
    %v543 = vcvt.s32.f32 %v542
    %544 = vadd.xlane.f32.xlu0 %v543
    %v545 = vpop.xlane.xlu0 %544
    %v546 = vmul.f32 %v545, 0.0625
    %547 = vmax.xlane.f32.xlu0 %v540
    %v548 = vpop.xlane.xlu0 %547
    %s549 = sadd.s32 %s471, 6
    %s550 = sld [smem:[#allocation2 + %s549]]
    %v551 = vstv %s550
    %v552 = vadd.f32 %v464, %v551
    %v553 = vsel %vm470, %v552, -inf
    %vm554 = vcmp.gt.f32.partialorder %v553, 0.0
    %v555 = vsel %vm554, 1, 0
    %v556 = vcvt.s32.f32 %v555
    %557 = vadd.xlane.f32.xlu0 %v556
    %v558 = vpop.xlane.xlu0 %557
    %v559 = vmul.f32 %v558, 0.0625
    %560 = vmax.xlane.f32.xlu0 %v553
    %v561 = vpop.xlane.xlu0 %560
    %s562 = sadd.s32 %s471, 7
    %s563 = sld [smem:[#allocation2 + %s562]]
    %v564 = vstv %s563
    %v565 = vadd.f32 %v466, %v564
    %v566 = vsel %vm470, %v565, -inf
    %vm567 = vcmp.gt.f32.partialorder %v566, 0.0
    %v568 = vsel %vm567, 1, 0
    %v569 = vcvt.s32.f32 %v568
    %570 = vadd.xlane.f32.xlu0 %v569
    %v571 = vpop.xlane.xlu0 %570
    %v572 = vmul.f32 %v571, 0.0625
    %573 = vmax.xlane.f32.xlu0 %v566
    %v574 = vpop.xlane.xlu0 %573
    %vm575 = vcmask 7168
    %v576 = vsel %vm575, %v481, %v494
    %vm577 = vcmask 15360
    %v578 = vsel %vm577, %v576, %v507
    %vm579 = vcmask 23552
    %v580 = vsel %vm579, %v578, %v520
    %vm581 = vcmask 31744
    %v582 = vsel %vm581, %v580, %v533
    %vm583 = vcmask 39936
    %v584 = vsel %vm583, %v582, %v546
    %vm585 = vcmask 48128
    %v586 = vsel %vm585, %v584, %v559
    %vm587 = vcmask 56320
    %v588 = vsel %vm587, %v586, %v572
    %vm589 = vcmask 64512
    %590 = vst.msk [vmem:[#allocation9] sm:$0xff] %vm589, %v588
    %v591 = vsel %vm575, %v483, %v496
    %v592 = vsel %vm577, %v591, %v509
    %v593 = vsel %vm579, %v592, %v522
    %v594 = vsel %vm581, %v593, %v535
    %v595 = vsel %vm583, %v594, %v548
    %v596 = vsel %vm585, %v595, %v561
    %v597 = vsel %vm587, %v596, %v574
    %598 = vst.msk [vmem:[#allocation10] sm:$0xff] %vm589, %v597
    // Predicated region
    $region26: #{tpu_custom_call.1} parent=1 // pred_check
      _
    $region27: #{tpu_custom_call.1} parent=1 // pred_check_branch
      %600 = sbr.rel (0) target = $region29
    $region28: #{tpu_custom_call.1} parent=1 // pred_region
      %s602 = ssub.s32 128, 128
      %603 = vsyncadd [#allocation4], %s602
      %s605 = sshll.u32 [#allocation9], 4
      %s606 = int_to_ptr.vmem [resolvable:$true] %s605
      %608 = dma.vmem_to_hbm [thread:$0]  %s606, 128, %s3, [#allocation4]
    $region29: #{tpu_custom_call.1} parent=1 // pred_fallthru
      _
    // Predicated region
    $region30: #{tpu_custom_call.1} parent=1 // pred_check
      _
    $region31: #{tpu_custom_call.1} parent=1 // pred_check_branch
      %610 = sbr.rel (0) target = $region33
    $region32: #{tpu_custom_call.1} parent=1 // pred_region
      %s612 = ssub.s32 128, 128
      %613 = vsyncadd [#allocation11], %s612
      %s615 = sshll.u32 [#allocation10], 4
      %s616 = int_to_ptr.vmem [resolvable:$true] %s615
      %618 = dma.vmem_to_hbm [thread:$0]  %s616, 128, %s4, [#allocation11]
    $region33: #{tpu_custom_call.1} parent=1 // pred_fallthru
      _
    // Predicated region
    $region34: #{tpu_custom_call.1} parent=1 // pred_check
      _
    $region35: #{tpu_custom_call.1} parent=1 // pred_check_branch
      %620 = sbr.rel (0) target = $region37
    $region36: #{tpu_custom_call.1} parent=1 // pred_region
      %621 = dma.done [#allocation4], 128
    $region37: #{tpu_custom_call.1} parent=1 // pred_fallthru
      _
    // Predicated region
    $region38: #{tpu_custom_call.1} parent=1 // pred_check
      _
    $region39: #{tpu_custom_call.1} parent=1 // pred_check_branch
      %623 = sbr.rel (0) target = $region41
    $region40: #{tpu_custom_call.1} parent=1 // pred_region
      %624 = dma.done [#allocation11], 128
    $region41: #{tpu_custom_call.1} parent=1 // pred_fallthru
      _
    %625 = vsyncpa [#allocation3], 1
    %626 = vsyncpa [#allocation8], 1
    %627 = vsyncpa [#allocation4], 1
    %628 = vsyncpa [#allocation11], 1
    %629 = vsyncpa [#allocation5], 1

</llo_original>
